<compile_context>
chip_gen: v6e
topology: v6e:2x2x1
jax: 0.10.0
libtpu: 0.0.40
codegen_flags: <defaults>
</compile_context>

<pallas_src>
import functools

import numpy as np

import jax
import jax.numpy as jnp
from jax.experimental import pallas as pl
from jax.experimental.pallas import tpu as pltpu

# ---------------- problem configuration (small, consistent with the module) ----------------
B = 2                 # batch
EXAMPLES_LEN = 3      # examples_len
CONTEXT_LEN = 4       # context_len
K = 4                 # number of VSA blocks (self.k)
D = 16                # per-block dimension
F = K * D             # per-panel feature dim
P = EXAMPLES_LEN + CONTEXT_LEN
P1 = P + 1            # panels after identity is appended (= examples_len + context_len + 1)
NUM_TERMS = 12        # default num_terms
HALF = NUM_TERMS // 2
BF = B * K * D        # = 128: fused (batch, block, block-dim) lane axis

# Wrapper-side interleave of term rows -> [n0,d0,n1,d1,n2,d2, n3,d3,n4,d4,n5,d5] so the kernel's
# tree reduction uses contiguous sublane slices only.
_TERM_PERM = np.arange(NUM_TERMS).reshape(2, HALF).T.reshape(-1)   # [0,6,1,7,2,8,3,9,4,10,5,11]


# ---------------------------------- Pallas kernel ----------------------------------
def _formula_kernel(x_ref, w_ref, fwd_ref, inv_ref, it_ref, o_ref):
    # x_ref   : (P1, BF)        VMEM  panels (incl. identity row) on sublanes, lane = b*F + k*D + d
    # w_ref   : (NUM_TERMS, P1) VMEM  stacked term weights, rows pre-permuted by _TERM_PERM
    # fwd_ref : (BF, 2*BF)      VMEM  block-diagonal [C | -S] forward-DFT matrix
    # inv_ref : (2*BF, BF)      VMEM  block-diagonal [[C],[-S]]/D inverse-DFT matrix
    # it_ref  : (1,)            SMEM  1 / temperature
    # o_ref   : (1, BF)         VMEM  lane-dense output
    inv_t = it_ref[0]

    # softmax(weights / T) over panels, for every learnable term at once: (NT, P1)
    logits = w_ref[...] * inv_t
    logits = logits - jnp.max(logits, axis=-1, keepdims=True)
    e = jnp.exp(logits)
    attn = e * pl.reciprocal(jnp.sum(e, axis=-1, keepdims=True), approx=False)

    # Weighted panel combination for all (term, b, k, d) at once on the MXU: (NT,P1)@(P1,BF).
    terms = jnp.dot(attn, x_ref[...], preferred_element_type=jnp.float32)      # (NT, BF)

    # Fused blockwise forward DFT of every term: [real | imag] = terms @ [C | -S].
    spec = jnp.dot(terms, fwd_ref[...], preferred_element_type=jnp.float32)    # (NT, 2*BF)
    tr = spec[:, :BF]                                                          # (NT, BF)
    ti = spec[:, BF:]                                                          # (NT, BF)

    def cmul(ar, ai, br, bi):
        return ar * br - ai * bi, ar * bi + ai * br

    # Tree-reduce both binding chains jointly (rows pre-interleaved in the wrapper):
    #   level 1: [n0,d0,n1,d1,n2,d2] x [n3,d3,n4,d4,n5,d5] -> [A0,B0,A1,B1,A2,B2]
    #   level 2: [A0,B0] x [A1,B1]                          -> [A0A1, B0B1]
    #   level 3: [A0A1,B0B1] x [A2,B2]                      -> [N, D]
    p_r, p_i = cmul(tr[0:6], ti[0:6], tr[6:12], ti[6:12])
    q_r, q_i = cmul(p_r[0:2], p_i[0:2], p_r[2:4], p_i[2:4])
    f_r, f_i = cmul(q_r, q_i, p_r[4:6], p_i[4:6])

    nr, ni = f_r[0:1], f_i[0:1]                                                # numerator spectrum
    dr, di = f_r[1:2], f_i[1:2]                                                # denominator spectrum

    # Unbinding = multiply numerator spectrum by conj(denominator spectrum).
    our = nr * dr + ni * di                                                    # (1, BF)
    oui = ni * dr - nr * di                                                    # (1, BF)

    # Fused inverse blockwise DFT (1/D folded into inv_ref): out = [Or | Oi] @ [[C],[-S]]/D.
    oroi = jnp.concatenate([our, oui], axis=-1)                                # (1, 2*BF)
    o_ref[...] = jnp.dot(oroi, inv_ref[...], preferred_element_type=jnp.float32)


# ---------------------------------- constants (cached once) ----------------------------------
@functools.lru_cache(maxsize=None)
def _dft_constants(num_blocks):
    """Fused block-diagonal DFT constants: ([C | -S], [[C],[-S]]/D), host numpy, built once."""
    n = np.arange(D)
    ang = 2.0 * np.pi * np.outer(n, n) / D
    cd = np.cos(ang).astype(np.float32)
    sd = np.sin(ang).astype(np.float32)
    eye = np.eye(num_blocks, dtype=np.float32)
    cbig = np.kron(eye, cd)                                   # (num_blocks*D, num_blocks*D)
    sbig = np.kron(eye, sd)
    fwd = np.concatenate([cbig, -sbig], axis=1)               # (BF, 2*BF)
    inv = (np.concatenate([cbig, -sbig], axis=0) / np.float32(D)).astype(np.float32)  # (2*BF, BF)
    return fwd, inv


# ---------------------------------- wrapper ----------------------------------
@jax.jit
def iravenx_forward(x, ctx, term_weights, temperature):
    """x: (B, EXAMPLES_LEN, F), ctx: (B, CONTEXT_LEN, F), term_weights: (NUM_TERMS, P1)."""
    b = x.shape[0]
    bf = b * K * D
    # Kernel constants (BF lane packing, tree-reduction structure) assume this exact config.
    assert bf == BF, f"layout assumes B*K*D == {BF}, got {bf}"
    assert term_weights.shape == (NUM_TERMS, P1)

    xa = jnp.concatenate([x, ctx], axis=1)                        # (B, P, F)
    xp = jnp.transpose(xa, (1, 0, 2)).reshape(P, bf)              # (P, B*F): lane = b*F + k*D + d
    ident = jnp.zeros((1, bf), xp.dtype).at[0, ::D].set(1.0)      # identity panel (d == 0)
    x_aug = jnp.concatenate([xp, ident], axis=0)                  # (P1, BF) = (8, 128)

    w_perm = term_weights[_TERM_PERM, :]                          # interleave num/den term rows
    fwd, inv = _dft_constants(b * K)                              # compile-time constants
    inv_temp = jnp.reshape(1.0 / jnp.asarray(temperature, jnp.float32), (1,))

    out = pl.pallas_call(
        _formula_kernel,
        out_shape=jax.ShapeDtypeStruct((1, bf), jnp.float32),
        grid_spec=pltpu.PrefetchScalarGridSpec(
            num_scalar_prefetch=0,
            grid=(1,),                                            # whole problem in one step
            in_specs=[
                pl.BlockSpec((P1, bf), lambda i: (0, 0)),
                pl.BlockSpec((NUM_TERMS, P1), lambda i: (0, 0)),
                pl.BlockSpec((bf, 2 * bf), lambda i: (0, 0)),
                pl.BlockSpec((2 * bf, bf), lambda i: (0, 0)),
                pl.BlockSpec(memory_space=pltpu.MemorySpace.SMEM),
            ],
            out_specs=pl.BlockSpec((1, bf), lambda i: (0, 0)),
        ),
        compiler_params=pltpu.CompilerParams(dimension_semantics=("arbitrary",)),
    )(x_aug, w_perm, fwd, inv, inv_temp)

    return out.reshape(b, K * D)                                  # matches output.view(B, -1)


# ---------------------------------- pure-JAX reference ----------------------------------
def reference_forward(x, ctx, term_weights, temperature):
    b = x.shape[0]
    xa = jnp.concatenate([x, ctx], axis=1).reshape(b, P, K, D)
    ident = jnp.zeros((b, 1, K, D), xa.dtype).at[:, :, :, 0].set(1.0)
    xa = jnp.concatenate([xa, ident], axis=1)                     # (B, P1, K, D)
    xf = xa.reshape(b, P1, F)

    attn = jax.nn.softmax(term_weights / temperature, axis=-1)    # (NT, P1)
    terms = jnp.einsum("tp,bpf->btf", attn, xf,
                       precision=jax.lax.Precision.HIGHEST).reshape(b, NUM_TERMS, K, D)

    def bind(a, c):    # circular convolution (block_binding2)
        return jnp.fft.irfft(jnp.fft.rfft(a) * jnp.fft.rfft(c), n=D).astype(jnp.float32)

    def unbind(a, c):  # circular correlation (block_unbinding2)
        return jnp.fft.irfft(jnp.fft.rfft(a) * jnp.conj(jnp.fft.rfft(c)), n=D).astype(jnp.float32)

    n = terms[:, 0]
    for i in range(1, HALF):
        n = bind(n, terms[:, i])
    dd = terms[:, HALF]
    for i in range(HALF + 1, NUM_TERMS):
        dd = bind(dd, terms[:, i])
    out = unbind(n, dd)
    return out.reshape(b, K * D)


# ---------------------------------- main ----------------------------------
if __name__ == "__main__":
    key = jax.random.PRNGKey(0)
    kx, kc, kw = jax.random.split(key, 3)

    x = jax.random.normal(kx, (B, EXAMPLES_LEN, F), dtype=jnp.float32)
    ctx = jax.random.normal(kc, (B, CONTEXT_LEN, F), dtype=jnp.float32)
    # self.terms: num_terms parameters, each randn(num_panels) -- stacked deterministically
    term_weights = jax.random.normal(kw, (NUM_TERMS, P1), dtype=jnp.float32)
    temperature = 1.0  # self.T

    out = iravenx_forward(x, ctx, term_weights, temperature)
    out = jax.block_until_ready(out)

    ref = reference_forward(x, ctx, term_weights, temperature)
    assert out.shape == (B, K * D), f"bad output shape {out.shape}"

    # The binding of 12 terms is multiplicative, so output magnitudes reach O(1e3..1e4) and the
    # kernel (blockwise matrix-DFT on the MXU, tree-ordered products) and the reference (XLA rFFT,
    # left-fold) accumulate rounding differently.  Compare with a scale-normalized max-abs error,
    # which still flags any semantic bug (wrong shift/conjugate/layout gives O(1) normalized error).
    max_err = float(jnp.max(jnp.abs(out - ref)))
    scale = max(float(jnp.max(jnp.abs(ref))), 1.0)
    rel_err = max_err / scale
    if not (rel_err <= 2e-2):
        raise RuntimeError(
            f"kernel/reference mismatch: max abs err = {max_err}, normalized err = {rel_err}")

    print("KERNEL_OK")
</pallas_src>

<mosaic_0001>
module attributes {stable_mosaic.version = 11 : i64} {
  func.func @_formula_kernel(%arg0: i32, %arg1: memref<8x128xf32, #tpu.memory_space<vmem>>, %arg2: memref<12x8xf32, #tpu.memory_space<vmem>>, %arg3: memref<128x256xf32, #tpu.memory_space<vmem>>, %arg4: memref<256x128xf32, #tpu.memory_space<vmem>>, %arg5: memref<1xf32, #tpu.memory_space<smem>>, %arg6: memref<1x128xf32, #tpu.memory_space<vmem>>) attributes {dimension_semantics = [#tpu.dimension_semantics<arbitrary>], iteration_bounds = array<i64: 1>, scalar_prefetch = 0 : i64, scratch_operands = 0 : i64, tpu.core_type = #tpu.core_type<tc>, window_params = [{pipeline_mode = #tpu.pipeline_mode<synchronous>, transform_indices = @transform_0, window_bounds = array<i64: 8, 128>}, {pipeline_mode = #tpu.pipeline_mode<synchronous>, transform_indices = @transform_1, window_bounds = array<i64: 12, 8>}, {pipeline_mode = #tpu.pipeline_mode<synchronous>, transform_indices = @transform_2, window_bounds = array<i64: 128, 256>}, {pipeline_mode = #tpu.pipeline_mode<synchronous>, transform_indices = @transform_3, window_bounds = array<i64: 256, 128>}, {transform_indices = @transform_4, window_bounds = array<i64: 1>}, {pipeline_mode = #tpu.pipeline_mode<synchronous>, transform_indices = @transform_5, window_bounds = array<i64: 1, 128>}]} {
    %c0 = arith.constant 0 : index
    %0 = memref.load %arg5[%c0] : memref<1xf32, #tpu.memory_space<smem>>
    %c0_0 = arith.constant 0 : index
    %c0_1 = arith.constant 0 : index
    %1 = vector.load %arg2[%c0_0, %c0_1] : memref<12x8xf32, #tpu.memory_space<vmem>>, vector<12x8xf32>
    %2 = vector.broadcast %0 : f32 to vector<12x8xf32>
    %3 = arith.mulf %1, %2 : vector<12x8xf32>
    %cst = arith.constant dense<0xFF800000> : vector<12xf32>
    %4 = vector.multi_reduction <maximumf>, %3, %cst [1] : vector<12x8xf32> to vector<12xf32>
    %5 = vector.shape_cast %4 : vector<12xf32> to vector<12x1xf32>
    %6 = vector.broadcast %5 : vector<12x1xf32> to vector<12x8xf32>
    %7 = arith.subf %3, %6 : vector<12x8xf32>
    %8 = math.exp %7 : vector<12x8xf32>
    %cst_2 = arith.constant dense<0.000000e+00> : vector<12xf32>
    %9 = vector.multi_reduction <add>, %8, %cst_2 [1] : vector<12x8xf32> to vector<12xf32>
    %10 = vector.shape_cast %9 : vector<12xf32> to vector<12x1xf32>
    %11 = tpu.reciprocal %10 : vector<12x1xf32> -> vector<12x1xf32>
    %12 = vector.broadcast %11 : vector<12x1xf32> to vector<12x8xf32>
    %13 = arith.mulf %8, %12 : vector<12x8xf32>
    %c0_3 = arith.constant 0 : index
    %c0_4 = arith.constant 0 : index
    %14 = vector.load %arg1[%c0_3, %c0_4] : memref<8x128xf32, #tpu.memory_space<vmem>>, vector<8x128xf32>
    %cst_5 = arith.constant dense<0.000000e+00> : vector<12x128xf32>
    %15 = tpu.matmul %13, %14, %cst_5 {dimension_numbers = #tpu.dot_dimension_numbers<[1], [0], [0], [1], [0, 0, 1, 1], [], []>} : vector<12x8xf32>, vector<8x128xf32>, vector<12x128xf32> -> vector<12x128xf32>
    %c0_6 = arith.constant 0 : index
    %c0_7 = arith.constant 0 : index
    %16 = vector.load %arg3[%c0_6, %c0_7] : memref<128x256xf32, #tpu.memory_space<vmem>>, vector<128x256xf32>
    %cst_8 = arith.constant dense<0.000000e+00> : vector<12x256xf32>
    %17 = tpu.matmul %15, %16, %cst_8 {dimension_numbers = #tpu.dot_dimension_numbers<[1], [0], [0], [1], [0, 0, 1, 1], [], []>} : vector<12x128xf32>, vector<128x256xf32>, vector<12x256xf32> -> vector<12x256xf32>
    %18 = vector.extract_strided_slice %17 {offsets = [0, 0], sizes = [12, 128], strides = [1, 1]} : vector<12x256xf32> to vector<12x128xf32>
    %19 = vector.extract_strided_slice %17 {offsets = [0, 128], sizes = [12, 128], strides = [1, 1]} : vector<12x256xf32> to vector<12x128xf32>
    %20 = vector.extract_strided_slice %18 {offsets = [0, 0], sizes = [6, 128], strides = [1, 1]} : vector<12x128xf32> to vector<6x128xf32>
    %21 = vector.extract_strided_slice %19 {offsets = [0, 0], sizes = [6, 128], strides = [1, 1]} : vector<12x128xf32> to vector<6x128xf32>
    %22 = vector.extract_strided_slice %18 {offsets = [6, 0], sizes = [6, 128], strides = [1, 1]} : vector<12x128xf32> to vector<6x128xf32>
    %23 = vector.extract_strided_slice %19 {offsets = [6, 0], sizes = [6, 128], strides = [1, 1]} : vector<12x128xf32> to vector<6x128xf32>
    %24 = arith.mulf %20, %22 : vector<6x128xf32>
    %25 = arith.mulf %21, %23 : vector<6x128xf32>
    %26 = arith.subf %24, %25 : vector<6x128xf32>
    %27 = arith.mulf %20, %23 : vector<6x128xf32>
    %28 = arith.mulf %21, %22 : vector<6x128xf32>
    %29 = arith.addf %27, %28 : vector<6x128xf32>
    %30 = vector.extract_strided_slice %26 {offsets = [0, 0], sizes = [2, 128], strides = [1, 1]} : vector<6x128xf32> to vector<2x128xf32>
    %31 = vector.extract_strided_slice %29 {offsets = [0, 0], sizes = [2, 128], strides = [1, 1]} : vector<6x128xf32> to vector<2x128xf32>
    %32 = vector.extract_strided_slice %26 {offsets = [2, 0], sizes = [2, 128], strides = [1, 1]} : vector<6x128xf32> to vector<2x128xf32>
    %33 = vector.extract_strided_slice %29 {offsets = [2, 0], sizes = [2, 128], strides = [1, 1]} : vector<6x128xf32> to vector<2x128xf32>
    %34 = arith.mulf %30, %32 : vector<2x128xf32>
    %35 = arith.mulf %31, %33 : vector<2x128xf32>
    %36 = arith.subf %34, %35 : vector<2x128xf32>
    %37 = arith.mulf %30, %33 : vector<2x128xf32>
    %38 = arith.mulf %31, %32 : vector<2x128xf32>
    %39 = arith.addf %37, %38 : vector<2x128xf32>
    %40 = vector.extract_strided_slice %26 {offsets = [4, 0], sizes = [2, 128], strides = [1, 1]} : vector<6x128xf32> to vector<2x128xf32>
    %41 = vector.extract_strided_slice %29 {offsets = [4, 0], sizes = [2, 128], strides = [1, 1]} : vector<6x128xf32> to vector<2x128xf32>
    %42 = arith.mulf %36, %40 : vector<2x128xf32>
    %43 = arith.mulf %39, %41 : vector<2x128xf32>
    %44 = arith.subf %42, %43 : vector<2x128xf32>
    %45 = arith.mulf %36, %41 : vector<2x128xf32>
    %46 = arith.mulf %39, %40 : vector<2x128xf32>
    %47 = arith.addf %45, %46 : vector<2x128xf32>
    %48 = vector.extract_strided_slice %44 {offsets = [0, 0], sizes = [1, 128], strides = [1, 1]} : vector<2x128xf32> to vector<1x128xf32>
    %49 = vector.extract_strided_slice %47 {offsets = [0, 0], sizes = [1, 128], strides = [1, 1]} : vector<2x128xf32> to vector<1x128xf32>
    %50 = vector.extract_strided_slice %44 {offsets = [1, 0], sizes = [1, 128], strides = [1, 1]} : vector<2x128xf32> to vector<1x128xf32>
    %51 = vector.extract_strided_slice %47 {offsets = [1, 0], sizes = [1, 128], strides = [1, 1]} : vector<2x128xf32> to vector<1x128xf32>
    %52 = arith.mulf %48, %50 : vector<1x128xf32>
    %53 = arith.mulf %49, %51 : vector<1x128xf32>
    %54 = arith.addf %52, %53 : vector<1x128xf32>
    %55 = arith.mulf %49, %50 : vector<1x128xf32>
    %56 = arith.mulf %48, %51 : vector<1x128xf32>
    %57 = arith.subf %55, %56 : vector<1x128xf32>
    %58 = tpu.concatenate %54, %57 in 1 : vector<1x128xf32>, vector<1x128xf32> -> vector<1x256xf32>
    %c0_9 = arith.constant 0 : index
    %c0_10 = arith.constant 0 : index
    %59 = vector.load %arg4[%c0_9, %c0_10] : memref<256x128xf32, #tpu.memory_space<vmem>>, vector<256x128xf32>
    %cst_11 = arith.constant dense<0.000000e+00> : vector<1x128xf32>
    %60 = tpu.matmul %58, %59, %cst_11 {dimension_numbers = #tpu.dot_dimension_numbers<[1], [0], [0], [1], [0, 0, 1, 1], [], []>} : vector<1x256xf32>, vector<256x128xf32>, vector<1x128xf32> -> vector<1x128xf32>
    %c0_12 = arith.constant 0 : index
    %c0_13 = arith.constant 0 : index
    %61 = vector.load %arg6[%c0_12, %c0_13] : memref<1x128xf32, #tpu.memory_space<vmem>>, vector<1x128xf32>
    tpu.vector_store %arg6[%c0_12, %c0_13], %60 {strides = array<i32>} : memref<1x128xf32, #tpu.memory_space<vmem>>, vector<1x128xf32>,
    return
  }
  func.func @transform_0(%arg0: i32) -> (i32, i32) {
    %c0_i32 = arith.constant 0 : i32
    %c0_i32_0 = arith.constant 0 : i32
    %c0_i32_1 = arith.constant 0 : i32
    return %c0_i32, %c0_i32_0 : i32, i32
  }
  func.func @transform_1(%arg0: i32) -> (i32, i32) {
    %c0_i32 = arith.constant 0 : i32
    %c0_i32_0 = arith.constant 0 : i32
    %c0_i32_1 = arith.constant 0 : i32
    return %c0_i32, %c0_i32_0 : i32, i32
  }
  func.func @transform_2(%arg0: i32) -> (i32, i32) {
    %c0_i32 = arith.constant 0 : i32
    %c0_i32_0 = arith.constant 0 : i32
    %c0_i32_1 = arith.constant 0 : i32
    return %c0_i32, %c0_i32_0 : i32, i32
  }
  func.func @transform_3(%arg0: i32) -> (i32, i32) {
    %c0_i32 = arith.constant 0 : i32
    %c0_i32_0 = arith.constant 0 : i32
    %c0_i32_1 = arith.constant 0 : i32
    return %c0_i32, %c0_i32_0 : i32, i32
  }
  func.func @transform_4(%arg0: i32) -> i32 {
    %c0_i32 = arith.constant 0 : i32
    %c0_i32_0 = arith.constant 0 : i32
    return %c0_i32 : i32
  }
  func.func @transform_5(%arg0: i32) -> (i32, i32) {
    %c0_i32 = arith.constant 0 : i32
    %c0_i32_0 = arith.constant 0 : i32
    %c0_i32_1 = arith.constant 0 : i32
    return %c0_i32, %c0_i32_0 : i32, i32
  }
}

</mosaic_0001>

<llo_original>
// kernel: iravenx_forward.1
$region0: #{iravenx_forward.1}
  #allocation0 [shape = 'u32[]', space=smem, size = 0x4, offset = 0x4, fixed_abs, tag = 'smem constant byte address 0x4 - core index']
  #allocation1 [shape = 'u32[144,128]{1,0:T(1,128)}', space=vmem, size = 0x12000, scoped, tag = 'internal scratch']
  #allocation2 [shape = 'f32[1]{0:T(128)S(6)}', space=smem, size = 0x200, scoped, tag = 'scoped memory for iravenx_forward.1']
  %s0 = inlined_call_operand.vmem [shape: f32[8,128], index: 0, kind: input, shape index: {}]
  %s1 = inlined_call_operand.vmem [shape: f32[12,8], index: 1, kind: input, shape index: {}]
  %s2 = inlined_call_operand.vmem [shape: f32[128,256], index: 2, kind: input, shape index: {}]
  %s3 = inlined_call_operand.hbm [shape: f32[256,128], index: 3, kind: input, shape index: {}]
  %s4 = inlined_call_operand.<no memory space> [shape: f32[1], index: 4, kind: input, shape index: {}]
  %s5 = inlined_call_operand.vmem [shape: f32[1,128], index: 5, kind: output, shape index: {}]
  %s6 = sld [smem:[#allocation0]]
  $region34: #{iravenx_forward.1} parent=0
    _
  %s8 = ssub.s32 1, %s6
  %s9 = scalar_select 0, %s8, %s6
  %10 = sst [smem:[#allocation2]] %s4
  $region1: #{iravenx_forward.1} parent=0
    #allocation3 [shape = 'u8[131072]{0}', space=vmem, size = 0x20000, scoped, tag = 'input window, operand 3, single buffered']
    #allocation4 [shape = 's32[1]{0}', space=sflag, size = 0x4, scoped, tag = 'scoped memory for iravenx_forward.1']
    %11 = vsyncpa [#allocation4], 0
    // Predicated region
    $region2: #{iravenx_forward.1} parent=1 // pred_check
      _
    $region3: #{iravenx_forward.1} parent=1 // pred_check_branch
      %13 = sbr.rel (0) target = $region5
    $region4: #{iravenx_forward.1} parent=1 // pred_region
      _
    $region5: #{iravenx_forward.1} parent=1 // pred_fallthru
      _
    // Predicated region
    $region6: #{iravenx_forward.1} parent=1 // pred_check
      _
    $region7: #{iravenx_forward.1} parent=1 // pred_check_branch
      %15 = sbr.rel (0) target = $region9
    $region8: #{iravenx_forward.1} parent=1 // pred_region
      _
    $region9: #{iravenx_forward.1} parent=1 // pred_fallthru
      _
    // Predicated region
    $region10: #{iravenx_forward.1} parent=1 // pred_check
      _
    $region11: #{iravenx_forward.1} parent=1 // pred_check_branch
      %17 = sbr.rel (0) target = $region13
    $region12: #{iravenx_forward.1} parent=1 // pred_region
      _
    $region13: #{iravenx_forward.1} parent=1 // pred_fallthru
      _
    // Predicated region
    $region14: #{iravenx_forward.1} parent=1 // pred_check
      _
    $region15: #{iravenx_forward.1} parent=1 // pred_check_branch
      %19 = sbr.rel (0) target = $region17
    $region16: #{iravenx_forward.1} parent=1 // pred_region
      %s21 = ssub.s32 4096, 4096
      %22 = vsyncadd [#allocation4], %s21
      %s23 = sshll.u32 [#allocation3], 4
      %s24 = int_to_ptr.vmem [resolvable:$true] %s23
      %29 = dma.hbm_to_vmem [thread:$0]  %s3, 4096, %s24, [#allocation4], 128, 128, 8
    $region17: #{iravenx_forward.1} parent=1 // pred_fallthru
      _
    // Predicated region
    $region18: #{iravenx_forward.1} parent=1 // pred_check
      _
    $region19: #{iravenx_forward.1} parent=1 // pred_check_branch
      %31 = sbr.rel (0) target = $region21
    $region20: #{iravenx_forward.1} parent=1 // pred_region
      _
    $region21: #{iravenx_forward.1} parent=1 // pred_fallthru
      _
    // Predicated region
    $region22: #{iravenx_forward.1} parent=1 // pred_check
      _
    $region23: #{iravenx_forward.1} parent=1 // pred_check_branch
      %33 = sbr.rel (0) target = $region25
    $region24: #{iravenx_forward.1} parent=1 // pred_region
      %34 = dma.done [#allocation4], 4096
    $region25: #{iravenx_forward.1} parent=1 // pred_fallthru
      _
    %s35 = sld [smem:[#allocation2]]
    %v36 = vld [vmem:[%s1] sm:$0xff]
    %v37 = vld [vmem:[%s1 + $0x8] sm:$0xf]
    %v38 = vstv %s35
    %v39 = vmul.f32 %v36, %v38
    %v40 = vmul.f32 %v37, %v38
    %vm41 = vcmask 64512
    %v42 = vsel %vm41, %v39, -inf
    %43 = vmax.xlane.f32.xlu0 %v42
    %v44 = vpop.xlane.xlu0 %43
    %vm45 = vcmask 60416
    %v46 = vsel %vm45, %v40, -inf
    %47 = vmax.xlane.f32.xlu0 %v46
    %v48 = vpop.xlane.xlu0 %47
    %v49 = vsub.f32 %v39, %v44
    %v50 = vsub.f32 %v40, %v48
    %v51 = vmul.f32 %v49, 1.442695
    %v52 = vpow.pop %v51
    %v53 = vmul.f32 %v50, 1.442695
    %v54 = vpow.pop %v53
    %v55 = vsel %vm41, %v52, 0.0
    %56 = vadd.xlane.f32.xlu0 %v55
    %v57 = vpop.xlane.xlu0 %56
    %v58 = vsel %vm45, %v54, 0.0
    %59 = vadd.xlane.f32.xlu0 %v58
    %v60 = vpop.xlane.xlu0 %59
    %v61 = vrcp.pop %v57
    %v62 = vrcp.pop %v60
    %v63 = vmul.f32 %v52, %v61
    %v64 = vmul.f32 %v54, %v62
    %v65 = vld [vmem:[%s0] sm:$0xff]
    %v67 = vsel %vm41, %v63, 0
    %v70 = vsel %vm41, %v64, 0
    %72 = vmatprep.subr.mxu0 0.0
    %73 = vmatpush1.msra.mxu0 0.0
    %74 = vmatprep.subr.mxu0 0.0
    %75 = vmatpush1.msra.mxu0 0.0
    %76 = vmatprep.subr.mxu0 0.0
    %77 = vmatpush1.msra.mxu0 0.0
    %78 = vmatprep.subr.mxu0 0.0
    %79 = vmatpush1.msra.mxu0 0.0
    %80 = vmatprep.subr.mxu0 0.0
    %81 = vmatpush1.msra.mxu0 0.0
    %82 = vmatprep.subr.mxu0 0.0
    %83 = vmatpush1.msra.mxu0 0.0
    %84 = vmatprep.subr.mxu0 0.0
    %85 = vmatpush1.msra.mxu0 0.0
    %86 = vmatprep.subr.mxu0 0.0
    %87 = vmatpush1.msra.mxu0 0.0
    %88 = vmatprep.subr.mxu0 0.0
    %89 = vmatpush1.msra.mxu0 0.0
    %90 = vmatprep.subr.mxu0 0.0
    %91 = vmatpush1.msra.mxu0 0.0
    %92 = vmatprep.subr.mxu0 0.0
    %93 = vmatpush1.msra.mxu0 0.0
    %94 = vmatprep.subr.mxu0 0.0
    %95 = vmatpush1.msra.mxu0 0.0
    %96 = vmatprep.subr.mxu0 0.0
    %97 = vmatpush1.msra.mxu0 0.0
    %98 = vmatprep.subr.mxu0 0.0
    %99 = vmatpush1.msra.mxu0 0.0
    %100 = vmatprep.subr.mxu0 0.0
    %101 = vmatpush1.msra.mxu0 0.0
    %102 = vmatprep.subr.mxu0 0.0
    %103 = vmatpush1.msra.mxu0 %v65
    %104 = vmatprep.subr.mxu0 0.0
    %105 = vmatpush2.msra.mxu0 0.0
    %106 = vmatprep.subr.mxu0 0.0
    %107 = vmatpush2.msra.mxu0 0.0
    %108 = vmatprep.subr.mxu0 0.0
    %109 = vmatpush2.msra.mxu0 0.0
    %110 = vmatprep.subr.mxu0 0.0
    %111 = vmatpush2.msra.mxu0 0.0
    %112 = vmatprep.subr.mxu0 0.0
    %113 = vmatpush2.msra.mxu0 0.0
    %114 = vmatprep.subr.mxu0 0.0
    %115 = vmatpush2.msra.mxu0 0.0
    %116 = vmatprep.subr.mxu0 0.0
    %117 = vmatpush2.msra.mxu0 0.0
    %118 = vmatprep.subr.mxu0 0.0
    %119 = vmatpush2.msra.mxu0 0.0
    %120 = vmatprep.subr.mxu0 0.0
    %121 = vmatpush2.msra.mxu0 0.0
    %122 = vmatprep.subr.mxu0 0.0
    %123 = vmatpush2.msra.mxu0 0.0
    %124 = vmatprep.subr.mxu0 0.0
    %125 = vmatpush2.msra.mxu0 0.0
    %126 = vmatprep.subr.mxu0 0.0
    %127 = vmatpush2.msra.mxu0 0.0
    %128 = vmatprep.subr.mxu0 0.0
    %129 = vmatpush2.msra.mxu0 0.0
    %130 = vmatprep.subr.mxu0 0.0
    %131 = vmatpush2.msra.mxu0 0.0
    %132 = vmatprep.subr.mxu0 0.0
    %133 = vmatpush2.msra.mxu0 0.0
    %134 = vmatprep.subr.mxu0 0.0
    %135 = vmatpush2.msra.mxu0 0.0
    %136 = vmatprep.mubr.f32.mxu0 0.0
    %137 = vmatmul.mubr.f32.gmra.mxu0 %v67
    %v138 = vpop.f32.mrf.mxu0
    %v139 = vadd.f32 0.0, %v138
    %v140 = vpop.f32.mrf.mxu0
    %141 = vmatprep.mubr.f32.mxu0 0.0
    %142 = vmatmul.mubr.f32.gmra.mxu0 %v70
    %v143 = vpop.f32.mrf.mxu0
    %v144 = vadd.f32 0.0, %v143
    %v145 = vpop.f32.mrf.mxu0
    %146 = vdwg.mxu0
    %v147 = vld [vmem:[%s2] sm:$0xff]
    %v148 = vld [vmem:[%s2 + $0x8] sm:$0xff]
    %v149 = vld [vmem:[%s2 + $0x10] sm:$0xff]
    %v150 = vld [vmem:[%s2 + $0x18] sm:$0xff]
    %v151 = vld [vmem:[%s2 + $0x20] sm:$0xff]
    %v152 = vld [vmem:[%s2 + $0x28] sm:$0xff]
    %v153 = vld [vmem:[%s2 + $0x30] sm:$0xff]
    %v154 = vld [vmem:[%s2 + $0x38] sm:$0xff]
    %v155 = vld [vmem:[%s2 + $0x40] sm:$0xff]
    %v156 = vld [vmem:[%s2 + $0x48] sm:$0xff]
    %v157 = vld [vmem:[%s2 + $0x50] sm:$0xff]
    %v158 = vld [vmem:[%s2 + $0x58] sm:$0xff]
    %v159 = vld [vmem:[%s2 + $0x60] sm:$0xff]
    %v160 = vld [vmem:[%s2 + $0x68] sm:$0xff]
    %v161 = vld [vmem:[%s2 + $0x70] sm:$0xff]
    %v162 = vld [vmem:[%s2 + $0x78] sm:$0xff]
    %v163 = vld [vmem:[%s2 + $0x80] sm:$0xff]
    %v164 = vld [vmem:[%s2 + $0x88] sm:$0xff]
    %v165 = vld [vmem:[%s2 + $0x90] sm:$0xff]
    %v166 = vld [vmem:[%s2 + $0x98] sm:$0xff]
    %v167 = vld [vmem:[%s2 + $0xa0] sm:$0xff]
    %v168 = vld [vmem:[%s2 + $0xa8] sm:$0xff]
    %v169 = vld [vmem:[%s2 + $0xb0] sm:$0xff]
    %v170 = vld [vmem:[%s2 + $0xb8] sm:$0xff]
    %v171 = vld [vmem:[%s2 + $0xc0] sm:$0xff]
    %v172 = vld [vmem:[%s2 + $0xc8] sm:$0xff]
    %v173 = vld [vmem:[%s2 + $0xd0] sm:$0xff]
    %v174 = vld [vmem:[%s2 + $0xd8] sm:$0xff]
    %v175 = vld [vmem:[%s2 + $0xe0] sm:$0xff]
    %v176 = vld [vmem:[%s2 + $0xe8] sm:$0xff]
    %v177 = vld [vmem:[%s2 + $0xf0] sm:$0xff]
    %v178 = vld [vmem:[%s2 + $0xf8] sm:$0xff]
    %179 = vmatprep.subr.mxu0 %v178
    %180 = vmatpush1.msra.mxu0 %v177
    %181 = vmatprep.subr.mxu0 %v176
    %182 = vmatpush1.msra.mxu0 %v175
    %183 = vmatprep.subr.mxu0 %v174
    %184 = vmatpush1.msra.mxu0 %v173
    %185 = vmatprep.subr.mxu0 %v172
    %186 = vmatpush1.msra.mxu0 %v171
    %187 = vmatprep.subr.mxu0 %v170
    %188 = vmatpush1.msra.mxu0 %v169
    %189 = vmatprep.subr.mxu0 %v168
    %190 = vmatpush1.msra.mxu0 %v167
    %191 = vmatprep.subr.mxu0 %v166
    %192 = vmatpush1.msra.mxu0 %v165
    %193 = vmatprep.subr.mxu0 %v164
    %194 = vmatpush1.msra.mxu0 %v163
    %195 = vmatprep.subr.mxu0 %v162
    %196 = vmatpush1.msra.mxu0 %v161
    %197 = vmatprep.subr.mxu0 %v160
    %198 = vmatpush1.msra.mxu0 %v159
    %199 = vmatprep.subr.mxu0 %v158
    %200 = vmatpush1.msra.mxu0 %v157
    %201 = vmatprep.subr.mxu0 %v156
    %202 = vmatpush1.msra.mxu0 %v155
    %203 = vmatprep.subr.mxu0 %v154
    %204 = vmatpush1.msra.mxu0 %v153
    %205 = vmatprep.subr.mxu0 %v152
    %206 = vmatpush1.msra.mxu0 %v151
    %207 = vmatprep.subr.mxu0 %v150
    %208 = vmatpush1.msra.mxu0 %v149
    %209 = vmatprep.subr.mxu0 %v148
    %210 = vmatpush1.msra.mxu0 %v147
    %211 = vmatprep.subr.mxu0 0.0
    %212 = vmatpush2.msra.mxu0 0.0
    %213 = vmatprep.subr.mxu0 0.0
    %214 = vmatpush2.msra.mxu0 0.0
    %215 = vmatprep.subr.mxu0 0.0
    %216 = vmatpush2.msra.mxu0 0.0
    %217 = vmatprep.subr.mxu0 0.0
    %218 = vmatpush2.msra.mxu0 0.0
    %219 = vmatprep.subr.mxu0 0.0
    %220 = vmatpush2.msra.mxu0 0.0
    %221 = vmatprep.subr.mxu0 0.0
    %222 = vmatpush2.msra.mxu0 0.0
    %223 = vmatprep.subr.mxu0 0.0
    %224 = vmatpush2.msra.mxu0 0.0
    %225 = vmatprep.subr.mxu0 0.0
    %226 = vmatpush2.msra.mxu0 0.0
    %227 = vmatprep.subr.mxu0 0.0
    %228 = vmatpush2.msra.mxu0 0.0
    %229 = vmatprep.subr.mxu0 0.0
    %230 = vmatpush2.msra.mxu0 0.0
    %231 = vmatprep.subr.mxu0 0.0
    %232 = vmatpush2.msra.mxu0 0.0
    %233 = vmatprep.subr.mxu0 0.0
    %234 = vmatpush2.msra.mxu0 0.0
    %235 = vmatprep.subr.mxu0 0.0
    %236 = vmatpush2.msra.mxu0 0.0
    %237 = vmatprep.subr.mxu0 0.0
    %238 = vmatpush2.msra.mxu0 0.0
    %239 = vmatprep.subr.mxu0 0.0
    %240 = vmatpush2.msra.mxu0 0.0
    %241 = vmatprep.subr.mxu0 0.0
    %242 = vmatpush2.msra.mxu0 0.0
    %243 = vmatprep.mubr.f32.mxu0 0.0
    %244 = vmatmul.mubr.f32.gmra.mxu0 %v139
    %v245 = vpop.f32.mrf.mxu0
    %v246 = vadd.f32 0.0, %v245
    %v247 = vpop.f32.mrf.mxu0
    %v248 = vadd.f32 0.0, %v247
    %249 = vmatprep.mubr.f32.mxu0 0.0
    %250 = vmatmul.mubr.f32.gmra.mxu0 %v144
    %v251 = vpop.f32.mrf.mxu0
    %v252 = vadd.f32 0.0, %v251
    %v253 = vpop.f32.mrf.mxu0
    %v254 = vadd.f32 0.0, %v253
    %255 = vdwg.mxu0
    %vm258 = vcmask 1041408
    %v259 = vrot.slane %v246, 6
    %v260 = vrot.slane %v252, 6
    %v261 = vsel %vm258, %v259, %v260
    %v263 = vmul.f32 %v246, %v261
    %v266 = vrot.slane %v248, 6
    %v267 = vrot.slane %v254, 6
    %v268 = vsel %vm258, %v266, %v267
    %v270 = vmul.f32 %v248, %v268
    %v271 = vsub.f32 %v263, %v270
    %v272 = vmul.f32 %v246, %v268
    %v273 = vmul.f32 %v248, %v261
    %v274 = vadd.f32 %v272, %v273
    %v276 = vrot.slane %v271, 2
    %v278 = vmul.f32 %v271, %v276
    %v280 = vrot.slane %v274, 2
    %v282 = vmul.f32 %v274, %v280
    %v283 = vsub.f32 %v278, %v282
    %v284 = vmul.f32 %v271, %v280
    %v285 = vmul.f32 %v274, %v276
    %v286 = vadd.f32 %v284, %v285
    %v287 = vrot.slane %v271, 4
    %v289 = vmul.f32 %v283, %v287
    %v290 = vrot.slane %v274, 4
    %v292 = vmul.f32 %v286, %v290
    %v293 = vsub.f32 %v289, %v292
    %v294 = vmul.f32 %v283, %v290
    %v295 = vmul.f32 %v286, %v287
    %v296 = vadd.f32 %v294, %v295
    %v298 = vrot.slane %v293, 1
    %v300 = vmul.f32 %v293, %v298
    %v302 = vrot.slane %v296, 1
    %v304 = vmul.f32 %v296, %v302
    %v305 = vadd.f32 %v300, %v304
    %v306 = vmul.f32 %v296, %v298
    %v307 = vmul.f32 %v293, %v302
    %v308 = vsub.f32 %v306, %v307
    %v309 = vld [vmem:[#allocation3] sm:$0xff]
    %v310 = vld [vmem:[#allocation3 + $0x8] sm:$0xff]
    %v311 = vld [vmem:[#allocation3 + $0x10] sm:$0xff]
    %v312 = vld [vmem:[#allocation3 + $0x18] sm:$0xff]
    %v313 = vld [vmem:[#allocation3 + $0x20] sm:$0xff]
    %v314 = vld [vmem:[#allocation3 + $0x28] sm:$0xff]
    %v315 = vld [vmem:[#allocation3 + $0x30] sm:$0xff]
    %v316 = vld [vmem:[#allocation3 + $0x38] sm:$0xff]
    %v317 = vld [vmem:[#allocation3 + $0x40] sm:$0xff]
    %v318 = vld [vmem:[#allocation3 + $0x48] sm:$0xff]
    %v319 = vld [vmem:[#allocation3 + $0x50] sm:$0xff]
    %v320 = vld [vmem:[#allocation3 + $0x58] sm:$0xff]
    %v321 = vld [vmem:[#allocation3 + $0x60] sm:$0xff]
    %v322 = vld [vmem:[#allocation3 + $0x68] sm:$0xff]
    %v323 = vld [vmem:[#allocation3 + $0x70] sm:$0xff]
    %v324 = vld [vmem:[#allocation3 + $0x78] sm:$0xff]
    %v325 = vld [vmem:[#allocation3 + $0x80] sm:$0xff]
    %v326 = vld [vmem:[#allocation3 + $0x88] sm:$0xff]
    %v327 = vld [vmem:[#allocation3 + $0x90] sm:$0xff]
    %v328 = vld [vmem:[#allocation3 + $0x98] sm:$0xff]
    %v329 = vld [vmem:[#allocation3 + $0xa0] sm:$0xff]
    %v330 = vld [vmem:[#allocation3 + $0xa8] sm:$0xff]
    %v331 = vld [vmem:[#allocation3 + $0xb0] sm:$0xff]
    %v332 = vld [vmem:[#allocation3 + $0xb8] sm:$0xff]
    %v333 = vld [vmem:[#allocation3 + $0xc0] sm:$0xff]
    %v334 = vld [vmem:[#allocation3 + $0xc8] sm:$0xff]
    %v335 = vld [vmem:[#allocation3 + $0xd0] sm:$0xff]
    %v336 = vld [vmem:[#allocation3 + $0xd8] sm:$0xff]
    %v337 = vld [vmem:[#allocation3 + $0xe0] sm:$0xff]
    %v338 = vld [vmem:[#allocation3 + $0xe8] sm:$0xff]
    %v339 = vld [vmem:[#allocation3 + $0xf0] sm:$0xff]
    %v340 = vld [vmem:[#allocation3 + $0xf8] sm:$0xff]
    %341 = vmatprep.subr.mxu0 0.0
    %342 = vmatpush1.msra.mxu0 %v324
    %343 = vmatprep.subr.mxu0 0.0
    %344 = vmatpush1.msra.mxu0 %v323
    %345 = vmatprep.subr.mxu0 0.0
    %346 = vmatpush1.msra.mxu0 %v322
    %347 = vmatprep.subr.mxu0 0.0
    %348 = vmatpush1.msra.mxu0 %v321
    %349 = vmatprep.subr.mxu0 0.0
    %350 = vmatpush1.msra.mxu0 %v320
    %351 = vmatprep.subr.mxu0 0.0
    %352 = vmatpush1.msra.mxu0 %v319
    %353 = vmatprep.subr.mxu0 0.0
    %354 = vmatpush1.msra.mxu0 %v318
    %355 = vmatprep.subr.mxu0 0.0
    %356 = vmatpush1.msra.mxu0 %v317
    %357 = vmatprep.subr.mxu0 0.0
    %358 = vmatpush1.msra.mxu0 %v316
    %359 = vmatprep.subr.mxu0 0.0
    %360 = vmatpush1.msra.mxu0 %v315
    %361 = vmatprep.subr.mxu0 0.0
    %362 = vmatpush1.msra.mxu0 %v314
    %363 = vmatprep.subr.mxu0 0.0
    %364 = vmatpush1.msra.mxu0 %v313
    %365 = vmatprep.subr.mxu0 0.0
    %366 = vmatpush1.msra.mxu0 %v312
    %367 = vmatprep.subr.mxu0 0.0
    %368 = vmatpush1.msra.mxu0 %v311
    %369 = vmatprep.subr.mxu0 0.0
    %370 = vmatpush1.msra.mxu0 %v310
    %371 = vmatprep.subr.mxu0 0.0
    %372 = vmatpush1.msra.mxu0 %v309
    %373 = vmatprep.subr.mxu0 0.0
    %374 = vmatpush2.msra.mxu0 %v340
    %375 = vmatprep.subr.mxu0 0.0
    %376 = vmatpush2.msra.mxu0 %v339
    %377 = vmatprep.subr.mxu0 0.0
    %378 = vmatpush2.msra.mxu0 %v338
    %379 = vmatprep.subr.mxu0 0.0
    %380 = vmatpush2.msra.mxu0 %v337
    %381 = vmatprep.subr.mxu0 0.0
    %382 = vmatpush2.msra.mxu0 %v336
    %383 = vmatprep.subr.mxu0 0.0
    %384 = vmatpush2.msra.mxu0 %v335
    %385 = vmatprep.subr.mxu0 0.0
    %386 = vmatpush2.msra.mxu0 %v334
    %387 = vmatprep.subr.mxu0 0.0
    %388 = vmatpush2.msra.mxu0 %v333
    %389 = vmatprep.subr.mxu0 0.0
    %390 = vmatpush2.msra.mxu0 %v332
    %391 = vmatprep.subr.mxu0 0.0
    %392 = vmatpush2.msra.mxu0 %v331
    %393 = vmatprep.subr.mxu0 0.0
    %394 = vmatpush2.msra.mxu0 %v330
    %395 = vmatprep.subr.mxu0 0.0
    %396 = vmatpush2.msra.mxu0 %v329
    %397 = vmatprep.subr.mxu0 0.0
    %398 = vmatpush2.msra.mxu0 %v328
    %399 = vmatprep.subr.mxu0 0.0
    %400 = vmatpush2.msra.mxu0 %v327
    %401 = vmatprep.subr.mxu0 0.0
    %402 = vmatpush2.msra.mxu0 %v326
    %403 = vmatprep.subr.mxu0 0.0
    %404 = vmatpush2.msra.mxu0 %v325
    %405 = vmatprep.mubr.f32.mxu0 %v308
    %406 = vmatmul.mubr.f32.gmra.mxu0 %v305
    %v407 = vpop.f32.mrf.mxu0
    %v408 = vadd.f32 0.0, %v407
    %v409 = vpop.f32.mrf.mxu0
    %410 = vdwg.mxu0
    %411 = vst [vmem:[%s5] sm:$0x1] %v408
    // Predicated region
    $region26: #{iravenx_forward.1} parent=1 // pred_check
      _
    $region27: #{iravenx_forward.1} parent=1 // pred_check_branch
      %413 = sbr.rel (0) target = $region29
    $region28: #{iravenx_forward.1} parent=1 // pred_region
      _
    $region29: #{iravenx_forward.1} parent=1 // pred_fallthru
      _
    // Predicated region
    $region30: #{iravenx_forward.1} parent=1 // pred_check
      _
    $region31: #{iravenx_forward.1} parent=1 // pred_check_branch
      %415 = sbr.rel (0) target = $region33
    $region32: #{iravenx_forward.1} parent=1 // pred_region
      _
    $region33: #{iravenx_forward.1} parent=1 // pred_fallthru
      _
    %416 = vsyncpa [#allocation4], 1

</llo_original>
